<compile_context>
chip_gen: v7x
topology: tpu7x:2x2x1
jax: 0.10.0
libtpu: 0.0.40
codegen_flags: <defaults>
</compile_context>

<pallas_src>
import functools
import math

import jax
import jax.numpy as jnp
from jax.experimental import pallas as pl
from jax.experimental.pallas import tpu as pltpu

_HID = 64


def _round_up(x, m):
    return ((x + m - 1) // m) * m


def _critic_kernel(xT_ref, w1t_ref, b1_ref, w2t_ref, b2_ref, w3r_ref, b3_ref,
                   o_ref, *, compute_dtype):
    """One batch tile of the critic MLP, feature-major (batch on lanes).

    xT_ref : (d_in, TM)  concat(state, goal).T block
    w1t_ref: (64, d_in)  b1_ref: (64, 1)        (w1t/w2t already in compute_dtype)
    w2t_ref: (64, 64)    b2_ref: (64, 1)
    w3r_ref: (1, 64)     b3_ref: (1, 1)         (layer 3 kept in f32)
    o_ref  : (1, TM)     lane-dense output block
    """
    x = xT_ref[...].astype(compute_dtype)

    # Layer 1 (single fused matmul, K = d_in): (64, d_in) @ (d_in, TM).
    h1 = jnp.dot(w1t_ref[...], x, preferred_element_type=jnp.float32)
    h1 = jnp.maximum(h1 + b1_ref[...], 0.0)              # f32 bias + ReLU

    # Layer 2: (64, 64) @ (64, TM).
    h2 = jnp.dot(w2t_ref[...], h1.astype(compute_dtype),
                 preferred_element_type=jnp.float32)
    h2 = jnp.maximum(h2 + b2_ref[...], 0.0)

    # Layer 3 (64 -> 1): (1, 64) @ (64, TM) -> (1, TM); lane-dense, no
    # transpose needed. Kept in f32 (negligible MXU work).
    q = jnp.dot(w3r_ref[...], h2, preferred_element_type=jnp.float32)
    o_ref[...] = (q + b3_ref[...]).astype(o_ref.dtype)


@functools.partial(jax.jit, static_argnames=("block_b", "compute_dtype"))
def critic_high_forward(state, goal, params, *, block_b=2048,
                        compute_dtype=jnp.bfloat16):
    """state: (B, state_dim), goal: (B, goal_dim) -> (B, 1) float32."""
    B, state_dim = state.shape
    goal_dim = goal.shape[1]
    d_in = state_dim + goal_dim
    w1, b1, w2, b2, w3, b3 = params

    # Feature-major re-layouts + one-time (hoisted) weight casts. These are a
    # few KB and fused under jit; the weights then stay VMEM-resident across
    # all grid steps (constant index_map below).
    w1t = w1.T.astype(compute_dtype)                 # (64, d_in)
    w2t = w2.T.astype(compute_dtype)                 # (64, 64)
    w3r = w3.reshape(1, _HID)                        # (1, 64), f32
    b1c = b1.reshape(_HID, 1)                        # (64, 1), f32
    b2c = b2.reshape(_HID, 1)                        # (64, 1), f32
    b3c = b3.reshape(1, 1)                           # (1, 1),  f32

    # Batch-on-lanes input: (d_in, B). ~32 B/row of extra wrapper traffic,
    # negligible vs. the removed lane-padding of (B, d_in) blocks.
    xT = jnp.concatenate([state.T, goal.T], axis=0)

    # Tile size: multiple of 128 (lane-dense output), capped by block_b, and
    # chosen so the grid has >=2 tiles whenever possible (v7x has 2 TCs and
    # the "parallel" axis only shards with >=2 grid steps).
    tm_cap = _round_up(block_b, 128)
    tm_half = _round_up(pl.cdiv(B, 2), 128)
    tm = max(128, min(tm_cap, tm_half))
    num_tiles = pl.cdiv(B, tm)
    bp = num_tiles * tm
    if bp != B:  # pad ragged batch; padded columns are sliced off afterwards
        xT = jnp.pad(xT, ((0, 0), (0, bp - B)))

    # Conservative per-call VMEM estimate (double-buffered I/O + f32/bf16
    # intermediates); only set an explicit limit if it exceeds the smallest
    # default scoped VMEM (16 MiB on v5e).
    est_vmem = tm * (2 * 8 * 4      # input block (d_in<=8 sublanes), x2 bufs
                     + 2 * 8 * 4    # output block (1, tm) padded to 8 sublanes
                     + 6 * _HID * 4)  # h1/h2 f32 + low-precision copies (upper bound)
    vmem_limit = None
    if est_vmem > 16 * 1024 * 1024:
        vmem_limit = min(est_vmem + (4 << 20), 64 * 1024 * 1024)

    flops = 2 * B * (d_in * _HID + _HID * _HID + _HID)
    bytes_accessed = 4 * (B * d_in + B) + 4 * (
        d_in * _HID + _HID * _HID + _HID + 3 * _HID + 1)
    cost = pl.CostEstimate(flops=flops, transcendentals=0,
                           bytes_accessed=bytes_accessed)

    kernel = functools.partial(_critic_kernel, compute_dtype=compute_dtype)
    # Constant index_map => weights/biases stay VMEM-resident across the grid.
    full = lambda a: pl.BlockSpec(a.shape, lambda i: (0, 0))

    out = pl.pallas_call(
        kernel,
        out_shape=jax.ShapeDtypeStruct((1, bp), jnp.float32),
        grid=(num_tiles,),
        in_specs=[
            pl.BlockSpec((d_in, tm), lambda i: (0, i)),   # xT batch tile
            full(w1t), full(b1c),
            full(w2t), full(b2c),
            full(w3r), full(b3c),
        ],
        out_specs=pl.BlockSpec((1, tm), lambda i: (0, i)),
        compiler_params=pltpu.CompilerParams(
            dimension_semantics=("parallel",),
            vmem_limit_bytes=vmem_limit),
        cost_estimate=cost,
    )(xT, w1t, b1c, w2t, b2c, w3r, b3c)

    return out[0, :B].reshape(B, 1)


def init_params(key, state_dim, goal_dim):
    """Deterministic init mirroring nn.Linear default (U[-1/sqrt(fan_in), ...]).

    Weights stored as (in_features, out_features); biases as (1, out_features).
    """
    d_in = state_dim + goal_dim
    dims = [(d_in, _HID), (_HID, _HID), (_HID, 1)]
    params = []
    for (fi, fo) in dims:
        key, kw, kb = jax.random.split(key, 3)
        bound = 1.0 / math.sqrt(fi)
        w = jax.random.uniform(kw, (fi, fo), jnp.float32, -bound, bound)
        b = jax.random.uniform(kb, (1, fo), jnp.float32, -bound, bound)
        params += [w, b]
    return tuple(params)


def reference_forward(state, goal, params):
    """Plain-JAX reference for correctness checking."""
    w1, b1, w2, b2, w3, b3 = params
    x = jnp.concatenate([state, goal], axis=1)
    h1 = jnp.maximum(x @ w1 + b1, 0.0)
    h2 = jnp.maximum(h1 @ w2 + b2, 0.0)
    return h2 @ w3 + b3


if __name__ == "__main__":
    key = jax.random.PRNGKey(0)
    # Small shapes consistent with the module; batch chosen so the grid has
    # multiple tiles (block_b=128 -> 3 tiles) and exercises ragged padding.
    batch, state_dim, goal_dim = 300, 6, 2

    k_params, k_state, k_goal = jax.random.split(key, 3)
    params = init_params(k_params, state_dim, goal_dim)
    state = jax.random.normal(k_state, (batch, state_dim), jnp.float32)
    goal = jax.random.normal(k_goal, (batch, goal_dim), jnp.float32)

    q_ref = reference_forward(state, goal, params)

    # f32 MXU path, small tiles (multi-tile grid + ragged padding exercised).
    q_f32 = critic_high_forward(state, goal, params, block_b=128,
                                compute_dtype=jnp.float32)
    q_f32 = jax.block_until_ready(q_f32)
    assert q_f32.shape == (batch, 1)
    assert jnp.allclose(q_f32, q_ref, atol=2e-5, rtol=2e-5), "f32 mismatch"

    # Default config: bf16 MXU inputs (fast path on v6e/v7x), f32 accumulation,
    # block_b=2048 (-> 2 balanced tiles for this batch). Loose tolerance.
    q_bf16 = critic_high_forward(state, goal, params)
    q_bf16 = jax.block_until_ready(q_bf16)
    assert q_bf16.shape == (batch, 1)
    assert jnp.allclose(q_bf16, q_ref, atol=1e-2, rtol=2e-2), "bf16 mismatch"

    print("KERNEL_OK")
</pallas_src>

<mosaic_0001>
module attributes {stable_mosaic.version = 11 : i64} {
  func.func @_critic_kernel(%arg0: i32, %arg1: memref<8x128xf32, #tpu.memory_space<vmem>>, %arg2: memref<64x8xf32, #tpu.memory_space<vmem>>, %arg3: memref<64x1xf32, #tpu.memory_space<vmem>>, %arg4: memref<64x64xf32, #tpu.memory_space<vmem>>, %arg5: memref<64x1xf32, #tpu.memory_space<vmem>>, %arg6: memref<1x64xf32, #tpu.memory_space<vmem>>, %arg7: memref<1x1xf32, #tpu.memory_space<vmem>>, %arg8: memref<1x128xf32, #tpu.memory_space<vmem>>) attributes {dimension_semantics = [#tpu.dimension_semantics<parallel>], iteration_bounds = array<i64: 3>, scalar_prefetch = 0 : i64, scratch_operands = 0 : i64, tpu.core_type = #tpu.core_type<tc>, window_params = [{transform_indices = @transform_0, window_bounds = array<i64: 8, 128>}, {pipeline_mode = #tpu.pipeline_mode<synchronous>, transform_indices = @transform_1, window_bounds = array<i64: 64, 8>}, {pipeline_mode = #tpu.pipeline_mode<synchronous>, transform_indices = @transform_2, window_bounds = array<i64: 64, 1>}, {pipeline_mode = #tpu.pipeline_mode<synchronous>, transform_indices = @transform_3, window_bounds = array<i64: 64, 64>}, {pipeline_mode = #tpu.pipeline_mode<synchronous>, transform_indices = @transform_4, window_bounds = array<i64: 64, 1>}, {pipeline_mode = #tpu.pipeline_mode<synchronous>, transform_indices = @transform_5, window_bounds = array<i64: 1, 64>}, {pipeline_mode = #tpu.pipeline_mode<synchronous>, transform_indices = @transform_6, window_bounds = array<i64: 1, 1>}, {transform_indices = @transform_7, window_bounds = array<i64: 1, 128>}]} {
    %c0 = arith.constant 0 : index
    %c0_0 = arith.constant 0 : index
    %0 = vector.load %arg1[%c0, %c0_0] : memref<8x128xf32, #tpu.memory_space<vmem>>, vector<8x128xf32>
    %c0_1 = arith.constant 0 : index
    %c0_2 = arith.constant 0 : index
    %1 = vector.load %arg2[%c0_1, %c0_2] : memref<64x8xf32, #tpu.memory_space<vmem>>, vector<64x8xf32>
    %cst = arith.constant dense<0.000000e+00> : vector<64x128xf32>
    %2 = tpu.matmul %1, %0, %cst {dimension_numbers = #tpu.dot_dimension_numbers<[1], [0], [0], [1], [0, 0, 1, 1], [], []>} : vector<64x8xf32>, vector<8x128xf32>, vector<64x128xf32> -> vector<64x128xf32>
    %c0_3 = arith.constant 0 : index
    %c0_4 = arith.constant 0 : index
    %3 = vector.load %arg3[%c0_3, %c0_4] : memref<64x1xf32, #tpu.memory_space<vmem>>, vector<64x1xf32>
    %4 = vector.broadcast %3 : vector<64x1xf32> to vector<64x128xf32>
    %5 = arith.addf %2, %4 : vector<64x128xf32>
    %cst_5 = arith.constant 0.000000e+00 : f32
    %6 = vector.broadcast %cst_5 : f32 to vector<64x128xf32>
    %7 = arith.maximumf %5, %6 : vector<64x128xf32>
    %c0_6 = arith.constant 0 : index
    %c0_7 = arith.constant 0 : index
    %8 = vector.load %arg4[%c0_6, %c0_7] : memref<64x64xf32, #tpu.memory_space<vmem>>, vector<64x64xf32>
    %cst_8 = arith.constant dense<0.000000e+00> : vector<64x128xf32>
    %9 = tpu.matmul %8, %7, %cst_8 {dimension_numbers = #tpu.dot_dimension_numbers<[1], [0], [0], [1], [0, 0, 1, 1], [], []>} : vector<64x64xf32>, vector<64x128xf32>, vector<64x128xf32> -> vector<64x128xf32>
    %c0_9 = arith.constant 0 : index
    %c0_10 = arith.constant 0 : index
    %10 = vector.load %arg5[%c0_9, %c0_10] : memref<64x1xf32, #tpu.memory_space<vmem>>, vector<64x1xf32>
    %11 = vector.broadcast %10 : vector<64x1xf32> to vector<64x128xf32>
    %12 = arith.addf %9, %11 : vector<64x128xf32>
    %cst_11 = arith.constant 0.000000e+00 : f32
    %13 = vector.broadcast %cst_11 : f32 to vector<64x128xf32>
    %14 = arith.maximumf %12, %13 : vector<64x128xf32>
    %c0_12 = arith.constant 0 : index
    %c0_13 = arith.constant 0 : index
    %15 = vector.load %arg6[%c0_12, %c0_13] : memref<1x64xf32, #tpu.memory_space<vmem>>, vector<1x64xf32>
    %cst_14 = arith.constant dense<0.000000e+00> : vector<1x128xf32>
    %16 = tpu.matmul %15, %14, %cst_14 {dimension_numbers = #tpu.dot_dimension_numbers<[1], [0], [0], [1], [0, 0, 1, 1], [], []>} : vector<1x64xf32>, vector<64x128xf32>, vector<1x128xf32> -> vector<1x128xf32>
    %c0_15 = arith.constant 0 : index
    %c0_16 = arith.constant 0 : index
    %17 = vector.load %arg7[%c0_15, %c0_16] : memref<1x1xf32, #tpu.memory_space<vmem>>, vector<1x1xf32>
    %18 = vector.broadcast %17 : vector<1x1xf32> to vector<1x128xf32>
    %19 = arith.addf %16, %18 : vector<1x128xf32>
    %c0_17 = arith.constant 0 : index
    %c0_18 = arith.constant 0 : index
    %20 = vector.load %arg8[%c0_17, %c0_18] : memref<1x128xf32, #tpu.memory_space<vmem>>, vector<1x128xf32>
    tpu.vector_store %arg8[%c0_17, %c0_18], %19 {strides = array<i32>} : memref<1x128xf32, #tpu.memory_space<vmem>>, vector<1x128xf32>,
    return
  }
  func.func @transform_0(%arg0: i32) -> (i32, i32) {
    %c0_i32 = arith.constant 0 : i32
    %c0_i32_0 = arith.constant 0 : i32
    return %c0_i32, %arg0 : i32, i32
  }
  func.func @transform_1(%arg0: i32) -> (i32, i32) {
    %c0_i32 = arith.constant 0 : i32
    %c0_i32_0 = arith.constant 0 : i32
    %c0_i32_1 = arith.constant 0 : i32
    return %c0_i32, %c0_i32_0 : i32, i32
  }
  func.func @transform_2(%arg0: i32) -> (i32, i32) {
    %c0_i32 = arith.constant 0 : i32
    %c0_i32_0 = arith.constant 0 : i32
    %c0_i32_1 = arith.constant 0 : i32
    return %c0_i32, %c0_i32_0 : i32, i32
  }
  func.func @transform_3(%arg0: i32) -> (i32, i32) {
    %c0_i32 = arith.constant 0 : i32
    %c0_i32_0 = arith.constant 0 : i32
    %c0_i32_1 = arith.constant 0 : i32
    return %c0_i32, %c0_i32_0 : i32, i32
  }
  func.func @transform_4(%arg0: i32) -> (i32, i32) {
    %c0_i32 = arith.constant 0 : i32
    %c0_i32_0 = arith.constant 0 : i32
    %c0_i32_1 = arith.constant 0 : i32
    return %c0_i32, %c0_i32_0 : i32, i32
  }
  func.func @transform_5(%arg0: i32) -> (i32, i32) {
    %c0_i32 = arith.constant 0 : i32
    %c0_i32_0 = arith.constant 0 : i32
    %c0_i32_1 = arith.constant 0 : i32
    return %c0_i32, %c0_i32_0 : i32, i32
  }
  func.func @transform_6(%arg0: i32) -> (i32, i32) {
    %c0_i32 = arith.constant 0 : i32
    %c0_i32_0 = arith.constant 0 : i32
    %c0_i32_1 = arith.constant 0 : i32
    return %c0_i32, %c0_i32_0 : i32, i32
  }
  func.func @transform_7(%arg0: i32) -> (i32, i32) {
    %c0_i32 = arith.constant 0 : i32
    %c0_i32_0 = arith.constant 0 : i32
    return %c0_i32, %arg0 : i32, i32
  }
}

</mosaic_0001>

<llo_original>
// kernel: critic_high_forward.1
$region0: #{critic_high_forward.1}
  #allocation0 [shape = 'u32[]', space=smem, size = 0x4, offset = 0x4, fixed_abs, tag = 'smem constant byte address 0x4 - core index']
  #allocation1 [shape = 'u32[144,128]{1,0:T(1,128)}', space=vmem, size = 0x12000, scoped, tag = 'internal scratch']
  #allocation2 [shape = 'f32[1,1]{1,0:T(1,128)S(1)}', space=vmem, size = 0x200, scoped, tag = 'scoped memory for critic_high_forward.1']
  %s0 = inlined_call_operand.vmem [shape: f32[8,384], index: 0, kind: input, shape index: {}]
  %s1 = inlined_call_operand.vmem [shape: f32[64,8], index: 1, kind: input, shape index: {}]
  %s2 = inlined_call_operand.vmem [shape: f32[64,1], index: 2, kind: input, shape index: {}]
  %s3 = inlined_call_operand.vmem [shape: f32[64,64], index: 3, kind: input, shape index: {}]
  %s4 = inlined_call_operand.vmem [shape: f32[64,1], index: 4, kind: input, shape index: {}]
  %s5 = inlined_call_operand.vmem [shape: f32[1,64], index: 5, kind: input, shape index: {}]
  %s6 = inlined_call_operand.<no memory space> [shape: f32[1,1], index: 6, kind: input, shape index: {}]
  %s7 = inlined_call_operand.vmem [shape: f32[1,384], index: 7, kind: output, shape index: {}]
  %s8 = sld [smem:[#allocation0]]
  $region61: #{critic_high_forward.1} parent=0
    _
  %s10 = ssub.s32 1, %s8
  %s11 = scalar_select 0, %s10, %s8
  %v12 = vstv %s6
  %13 = vst [vmem:[#allocation2] sm:$0x1] %v12
  loop: start=0, step=1, limit=5
  $region2: #{critic_high_forward.1} parent=0 // loop_pre_header
    _
  $region3: #{critic_high_forward.1} parent=0 // loop_header
    %s15 = sphi 0, %s19
    %p16 = scmp.ge.s32.totalorder %s15, 5
    %s25 = sphi 0, %s27
    %s28 = sphi 0, %s25
    %s29 = sphi 0, %s28
    %s45 = sphi 0, %s29
    %s49 = sphi 0, %s49
    %s51 = sphi 0, %s49
    %s52 = sphi 0, %s51
    %s66 = sphi 0, %s52
    %s70 = sphi 0, %s70
    %s72 = sphi 0, %s70
    %s73 = sphi 0, %s72
    %s87 = sphi 0, %s73
    %s91 = sphi 0, %s91
    %s93 = sphi 0, %s91
    %s94 = sphi 0, %s93
    %s108 = sphi 0, %s94
    %s112 = sphi 0, %s112
    %s114 = sphi 0, %s112
    %s115 = sphi 0, %s114
    %s129 = sphi 0, %s115
    %s133 = sphi 0, %s133
    %s135 = sphi 0, %s133
    %s136 = sphi 0, %s135
    %s150 = sphi 0, %s136
    %s154 = sphi 0, %s154
    %s156 = sphi 0, %s154
    %s157 = sphi 0, %s156
    %s171 = sphi 0, %s157
    %s177 = sphi 0, %s179
    %s180 = sphi 0, %s177
    %s181 = sphi 0, %s180
    %s197 = sphi 0, %s181
  $region4: #{critic_high_forward.1} parent=0 // loop_header_branch
    %18 = sbr.rel (%p16) target = $region8
  $region5: #{critic_high_forward.1} parent=0 // loop_body
    %s20 = ssub.s32 %s15, 1
    %s21 = ssub.s32 %s15, 2
    %s22 = sadd.s32 %s15, 1
    %s23 = ssub.s32 %s15, %s22
    %p24 = scmp.eq.s32.totalorder %s23, 0
    %s26 = sadd.s32 %s25, 1
    %s27 = scalar_select %p24, %s25, %s26
    %p30 = pneg %p24
    %p31 = scmp.eq.s32.totalorder %s15, 2
    %p32 = por %p30, %p31
    %p33 = scmp.ne.s32.totalorder %s25, %s28
    %p34 = scmp.eq.s32.totalorder %s15, 0
    %p35 = por %p33, %p34
    %p36 = scmp.ne.s32.totalorder %s25, %s28
    %p37 = scmp.eq.s32.totalorder %s20, 2
    %p38 = por %p36, %p37
    %p39 = scmp.ne.s32.totalorder %s28, %s29
    %p40 = scmp.eq.s32.totalorder %s20, 0
    %p41 = por %p39, %p40
    %p42 = scmp.ne.s32.totalorder %s28, %s29
    %p43 = scmp.eq.s32.totalorder %s21, 2
    %p44 = por %p42, %p43
    %p46 = scmp.ne.s32.totalorder %s29, %s45
    %p47 = scmp.eq.s32.totalorder %s21, 0
    %p48 = por %p46, %p47
    %s50 = sadd.s32 %s49, 1
    %p53 = scmp.eq.s32.totalorder %s15, 2
    %p54 = scmp.ne.s32.totalorder %s49, %s51
    %p55 = scmp.eq.s32.totalorder %s15, 0
    %p56 = por %p54, %p55
    %p57 = scmp.ne.s32.totalorder %s49, %s51
    %p58 = scmp.eq.s32.totalorder %s20, 2
    %p59 = por %p57, %p58
    %p60 = scmp.ne.s32.totalorder %s51, %s52
    %p61 = scmp.eq.s32.totalorder %s20, 0
    %p62 = por %p60, %p61
    %p63 = scmp.ne.s32.totalorder %s51, %s52
    %p64 = scmp.eq.s32.totalorder %s21, 2
    %p65 = por %p63, %p64
    %p67 = scmp.ne.s32.totalorder %s52, %s66
    %p68 = scmp.eq.s32.totalorder %s21, 0
    %p69 = por %p67, %p68
    %s71 = sadd.s32 %s70, 1
    %p74 = scmp.eq.s32.totalorder %s15, 2
    %p75 = scmp.ne.s32.totalorder %s70, %s72
    %p76 = scmp.eq.s32.totalorder %s15, 0
    %p77 = por %p75, %p76
    %p78 = scmp.ne.s32.totalorder %s70, %s72
    %p79 = scmp.eq.s32.totalorder %s20, 2
    %p80 = por %p78, %p79
    %p81 = scmp.ne.s32.totalorder %s72, %s73
    %p82 = scmp.eq.s32.totalorder %s20, 0
    %p83 = por %p81, %p82
    %p84 = scmp.ne.s32.totalorder %s72, %s73
    %p85 = scmp.eq.s32.totalorder %s21, 2
    %p86 = por %p84, %p85
    %p88 = scmp.ne.s32.totalorder %s73, %s87
    %p89 = scmp.eq.s32.totalorder %s21, 0
    %p90 = por %p88, %p89
    %s92 = sadd.s32 %s91, 1
    %p95 = scmp.eq.s32.totalorder %s15, 2
    %p96 = scmp.ne.s32.totalorder %s91, %s93
    %p97 = scmp.eq.s32.totalorder %s15, 0
    %p98 = por %p96, %p97
    %p99 = scmp.ne.s32.totalorder %s91, %s93
    %p100 = scmp.eq.s32.totalorder %s20, 2
    %p101 = por %p99, %p100
    %p102 = scmp.ne.s32.totalorder %s93, %s94
    %p103 = scmp.eq.s32.totalorder %s20, 0
    %p104 = por %p102, %p103
    %p105 = scmp.ne.s32.totalorder %s93, %s94
    %p106 = scmp.eq.s32.totalorder %s21, 2
    %p107 = por %p105, %p106
    %p109 = scmp.ne.s32.totalorder %s94, %s108
    %p110 = scmp.eq.s32.totalorder %s21, 0
    %p111 = por %p109, %p110
    %s113 = sadd.s32 %s112, 1
    %p116 = scmp.eq.s32.totalorder %s15, 2
    %p117 = scmp.ne.s32.totalorder %s112, %s114
    %p118 = scmp.eq.s32.totalorder %s15, 0
    %p119 = por %p117, %p118
    %p120 = scmp.ne.s32.totalorder %s112, %s114
    %p121 = scmp.eq.s32.totalorder %s20, 2
    %p122 = por %p120, %p121
    %p123 = scmp.ne.s32.totalorder %s114, %s115
    %p124 = scmp.eq.s32.totalorder %s20, 0
    %p125 = por %p123, %p124
    %p126 = scmp.ne.s32.totalorder %s114, %s115
    %p127 = scmp.eq.s32.totalorder %s21, 2
    %p128 = por %p126, %p127
    %p130 = scmp.ne.s32.totalorder %s115, %s129
    %p131 = scmp.eq.s32.totalorder %s21, 0
    %p132 = por %p130, %p131
    %s134 = sadd.s32 %s133, 1
    %p137 = scmp.eq.s32.totalorder %s15, 2
    %p138 = scmp.ne.s32.totalorder %s133, %s135
    %p139 = scmp.eq.s32.totalorder %s15, 0
    %p140 = por %p138, %p139
    %p141 = scmp.ne.s32.totalorder %s133, %s135
    %p142 = scmp.eq.s32.totalorder %s20, 2
    %p143 = por %p141, %p142
    %p144 = scmp.ne.s32.totalorder %s135, %s136
    %p145 = scmp.eq.s32.totalorder %s20, 0
    %p146 = por %p144, %p145
    %p147 = scmp.ne.s32.totalorder %s135, %s136
    %p148 = scmp.eq.s32.totalorder %s21, 2
    %p149 = por %p147, %p148
    %p151 = scmp.ne.s32.totalorder %s136, %s150
    %p152 = scmp.eq.s32.totalorder %s21, 0
    %p153 = por %p151, %p152
    %s155 = sadd.s32 %s154, 1
    %p158 = scmp.eq.s32.totalorder %s15, 2
    %p159 = scmp.ne.s32.totalorder %s154, %s156
    %p160 = scmp.eq.s32.totalorder %s15, 0
    %p161 = por %p159, %p160
    %p162 = scmp.ne.s32.totalorder %s154, %s156
    %p163 = scmp.eq.s32.totalorder %s20, 2
    %p164 = por %p162, %p163
    %p165 = scmp.ne.s32.totalorder %s156, %s157
    %p166 = scmp.eq.s32.totalorder %s20, 0
    %p167 = por %p165, %p166
    %p168 = scmp.ne.s32.totalorder %s156, %s157
    %p169 = scmp.eq.s32.totalorder %s21, 2
    %p170 = por %p168, %p169
    %p172 = scmp.ne.s32.totalorder %s157, %s171
    %p173 = scmp.eq.s32.totalorder %s21, 0
    %p174 = por %p172, %p173
    %s175 = ssub.s32 %s15, %s22
    %p176 = scmp.eq.s32.totalorder %s175, 0
    %s178 = sadd.s32 %s177, 1
    %s179 = scalar_select %p176, %s177, %s178
    %p182 = pneg %p176
    %p183 = scmp.eq.s32.totalorder %s15, 2
    %p184 = por %p182, %p183
    %p185 = scmp.ne.s32.totalorder %s177, %s180
    %p186 = scmp.eq.s32.totalorder %s15, 0
    %p187 = por %p185, %p186
    %p188 = scmp.ne.s32.totalorder %s177, %s180
    %p189 = scmp.eq.s32.totalorder %s20, 2
    %p190 = por %p188, %p189
    %p191 = scmp.ne.s32.totalorder %s180, %s181
    %p192 = scmp.eq.s32.totalorder %s20, 0
    %p193 = por %p191, %p192
    %p194 = scmp.ne.s32.totalorder %s180, %s181
    %p195 = scmp.eq.s32.totalorder %s21, 2
    %p196 = por %p194, %p195
    %p198 = scmp.ne.s32.totalorder %s181, %s197
    %p199 = scmp.eq.s32.totalorder %s21, 0
    %p200 = por %p198, %p199
    %p201 = scmp.le.s32.totalorder 1, %s15
    %p202 = scmp.lt.s32.totalorder %s15, 4
    %p203 = pnand %p201, %p202
    %p204 = pneg %p203
    // Predicated region
    $region9: #{critic_high_forward.1} parent=5 // pred_check
      _
    $region10: #{critic_high_forward.1} parent=5 // pred_check_branch
      %206 = sbr.rel (%p203) target = $region12
    $region11: #{critic_high_forward.1} parent=5 // pred_region
      %s207 = ssub.s32 %s15, 1
      // Predicated region
      $region13: #{critic_high_forward.1} parent=11 // pred_check
        %p208 = pneg %p62
      $region14: #{critic_high_forward.1} parent=11 // pred_check_branch
        %210 = sbr.rel (%p208) target = $region16
      $region15: #{critic_high_forward.1} parent=11 // pred_region
        _
      $region16: #{critic_high_forward.1} parent=11 // pred_fallthru
        _
      // Predicated region
      $region17: #{critic_high_forward.1} parent=11 // pred_check
        %p211 = pneg %p83
      $region18: #{critic_high_forward.1} parent=11 // pred_check_branch
        %213 = sbr.rel (%p211) target = $region20
      $region19: #{critic_high_forward.1} parent=11 // pred_region
        _
      $region20: #{critic_high_forward.1} parent=11 // pred_fallthru
        _
      // Predicated region
      $region21: #{critic_high_forward.1} parent=11 // pred_check
        %p214 = pneg %p104
      $region22: #{critic_high_forward.1} parent=11 // pred_check_branch
        %216 = sbr.rel (%p214) target = $region24
      $region23: #{critic_high_forward.1} parent=11 // pred_region
        _
      $region24: #{critic_high_forward.1} parent=11 // pred_fallthru
        _
      // Predicated region
      $region25: #{critic_high_forward.1} parent=11 // pred_check
        %p217 = pneg %p125
      $region26: #{critic_high_forward.1} parent=11 // pred_check_branch
        %219 = sbr.rel (%p217) target = $region28
      $region27: #{critic_high_forward.1} parent=11 // pred_region
        _
      $region28: #{critic_high_forward.1} parent=11 // pred_fallthru
        _
      // Predicated region
      $region29: #{critic_high_forward.1} parent=11 // pred_check
        %p220 = pneg %p146
      $region30: #{critic_high_forward.1} parent=11 // pred_check_branch
        %222 = sbr.rel (%p220) target = $region32
      $region31: #{critic_high_forward.1} parent=11 // pred_region
        _
      $region32: #{critic_high_forward.1} parent=11 // pred_fallthru
        _
      // Predicated region
      $region33: #{critic_high_forward.1} parent=11 // pred_check
        %p223 = pneg %p167
      $region34: #{critic_high_forward.1} parent=11 // pred_check_branch
        %225 = sbr.rel (%p223) target = $region36
      $region35: #{critic_high_forward.1} parent=11 // pred_region
        _
      $region36: #{critic_high_forward.1} parent=11 // pred_fallthru
        _
    $region12: #{critic_high_forward.1} parent=5 // pred_fallthru
      _
    %p226 = scmp.lt.s32.totalorder %s15, 3
    // Predicated region
    $region37: #{critic_high_forward.1} parent=5 // pred_check
      %p227 = pneg %p226
    $region38: #{critic_high_forward.1} parent=5 // pred_check_branch
      %229 = sbr.rel (%p227) target = $region40
    $region39: #{critic_high_forward.1} parent=5 // pred_region
      // Predicated region
      $region41: #{critic_high_forward.1} parent=39 // pred_check
        %p230 = pneg %p35
      $region42: #{critic_high_forward.1} parent=39 // pred_check_branch
        %232 = sbr.rel (%p230) target = $region44
      $region43: #{critic_high_forward.1} parent=39 // pred_region
        %p233 = scmp.lt.s32.totalorder %s15, 2
        %s234 = scalar_select %p233, %s15, 2
        %s235 = smul.addr %s234, 8
        %s236 = scalar_lea.vmem %s0, %s235
      $region44: #{critic_high_forward.1} parent=39 // pred_fallthru
        _
    $region40: #{critic_high_forward.1} parent=5 // pred_fallthru
      _
    %p237 = scmp.le.s32.totalorder 1, %s15
    %p238 = scmp.lt.s32.totalorder %s15, 4
    %p239 = pnand %p237, %p238
    %p240 = pneg %p239
    // Predicated region
    $region45: #{critic_high_forward.1} parent=5 // pred_check
      _
    $region46: #{critic_high_forward.1} parent=5 // pred_check_branch
      %242 = sbr.rel (%p239) target = $region48
    $region47: #{critic_high_forward.1} parent=5 // pred_region
      %s243 = ssub.s32 %s15, 1
      %p244 = scmp.lt.s32.totalorder %s20, 2
      %s245 = scalar_select %p244, %s20, 2
      %s246 = smul.addr %s245, 8
      %s247 = scalar_lea.vmem %s0, %s246
      %p248 = pneg %p41
      %p249 = pneg %p38
      %p250 = pneg %p62
      %p251 = pneg %p59
      %p252 = pneg %p83
      %p253 = pneg %p80
      %p254 = pneg %p104
      %p255 = pneg %p101
      %p256 = pneg %p125
      %p257 = pneg %p122
      %p258 = pneg %p146
      %p259 = pneg %p143
      %p260 = pneg %p167
      %p261 = pneg %p164
      %p262 = pneg %p193
      %p263 = pneg %p190
      %p264 = scmp.lt.s32.totalorder %s20, 2
      %s265 = scalar_select %p264, %s20, 2
      %s266 = scalar_lea.vmem %s7, %s265
      %p267 = scmp.lt.s32.totalorder %s20, 2
      %s268 = scalar_select %p267, %s20, 2
      %s269 = smul.addr %s268, 8
      %s270 = scalar_lea.vmem %s0, %s269
      %p271 = scmp.lt.s32.totalorder %s20, 2
      %s272 = scalar_select %p271, %s20, 2
      %s273 = scalar_lea.vmem %s7, %s272
      %v274 = vld [vmem:[%s270] sm:$0xff]
      %v275 = vld [vmem:[%s1] sm:$0xff]
      %v276 = vld [vmem:[%s1 + $0x8] sm:$0xff]
      %v277 = vld [vmem:[%s1 + $0x10] sm:$0xff]
      %v278 = vld [vmem:[%s1 + $0x18] sm:$0xff]
      %v279 = vld [vmem:[%s1 + $0x20] sm:$0xff]
      %v280 = vld [vmem:[%s1 + $0x28] sm:$0xff]
      %v281 = vld [vmem:[%s1 + $0x30] sm:$0xff]
      %v282 = vld [vmem:[%s1 + $0x38] sm:$0xff]
      %v283 = vld [vmem:[%s2] sm:$0xff]
      %v284 = vld [vmem:[%s2 + $0x8] sm:$0xff]
      %v285 = vld [vmem:[%s2 + $0x10] sm:$0xff]
      %v286 = vld [vmem:[%s2 + $0x18] sm:$0xff]
      %v287 = vld [vmem:[%s2 + $0x20] sm:$0xff]
      %v288 = vld [vmem:[%s2 + $0x28] sm:$0xff]
      %v289 = vld [vmem:[%s2 + $0x30] sm:$0xff]
      %v290 = vld [vmem:[%s2 + $0x38] sm:$0xff]
      %292 = vset.pattern.permute.xlu0 0
      %293 = vperm.xlu0 %292, %v283
      %v294 = vpop.permute.xlu0 %293
      %297 = vset.pattern.permute.xlu0 0
      %298 = vperm.xlu0 %297, %v284
      %v299 = vpop.permute.xlu0 %298
      %302 = vset.pattern.permute.xlu0 0
      %303 = vperm.xlu0 %302, %v285
      %v304 = vpop.permute.xlu0 %303
      %307 = vset.pattern.permute.xlu0 0
      %308 = vperm.xlu0 %307, %v286
      %v309 = vpop.permute.xlu0 %308
      %312 = vset.pattern.permute.xlu0 0
      %313 = vperm.xlu0 %312, %v287
      %v314 = vpop.permute.xlu0 %313
      %317 = vset.pattern.permute.xlu0 0
      %318 = vperm.xlu0 %317, %v288
      %v319 = vpop.permute.xlu0 %318
      %322 = vset.pattern.permute.xlu0 0
      %323 = vperm.xlu0 %322, %v289
      %v324 = vpop.permute.xlu0 %323
      %327 = vset.pattern.permute.xlu0 0
      %328 = vperm.xlu0 %327, %v290
      %v329 = vpop.permute.xlu0 %328
      %vm331 = vcmask 64512
      %v333 = vsel %vm331, %v275, 0
      %v336 = vsel %vm331, %v276, 0
      %v339 = vsel %vm331, %v277, 0
      %v342 = vsel %vm331, %v278, 0
      %v345 = vsel %vm331, %v279, 0
      %v348 = vsel %vm331, %v280, 0
      %v351 = vsel %vm331, %v281, 0
      %v354 = vsel %vm331, %v282, 0
      %356 = vmatprep.subr.mxu0 0.0
      %357 = vmatpush1.msra.mxu0 %v274
      %358 = vmatprep.subr.mxu0 0.0
      %359 = vmatpush1.msra.mxu0 0.0
      %360 = vmatprep.subr.mxu0 0.0
      %361 = vmatpush1.msra.mxu0 0.0
      %362 = vmatprep.subr.mxu0 0.0
      %363 = vmatpush1.msra.mxu0 0.0
      %364 = vmatprep.subr.mxu0 0.0
      %365 = vmatpush1.msra.mxu0 0.0
      %366 = vmatprep.subr.mxu0 0.0
      %367 = vmatpush1.msra.mxu0 0.0
      %368 = vmatprep.subr.mxu0 0.0
      %369 = vmatpush1.msra.mxu0 0.0
      %370 = vmatprep.subr.mxu0 0.0
      %371 = vmatpush1.msra.mxu0 0.0
      %372 = vmatprep.subr.mxu0 0.0
      %373 = vmatpush1.msra.mxu0 0.0
      %374 = vmatprep.subr.mxu0 0.0
      %375 = vmatpush1.msra.mxu0 0.0
      %376 = vmatprep.subr.mxu0 0.0
      %377 = vmatpush1.msra.mxu0 0.0
      %378 = vmatprep.subr.mxu0 0.0
      %379 = vmatpush1.msra.mxu0 0.0
      %380 = vmatprep.subr.mxu0 0.0
      %381 = vmatpush1.msra.mxu0 0.0
      %382 = vmatprep.subr.mxu0 0.0
      %383 = vmatpush1.msra.mxu0 0.0
      %384 = vmatprep.subr.mxu0 0.0
      %385 = vmatpush1.msra.mxu0 0.0
      %386 = vmatprep.subr.mxu0 0.0
      %387 = vmatpush1.msra.mxu0 0.0
      %388 = vmatprep.subr.mxu0 0.0
      %389 = vmatpush1.msra.mxu0 0.0
      %390 = vmatprep.subr.mxu0 0.0
      %391 = vmatpush1.msra.mxu0 0.0
      %392 = vmatprep.subr.mxu0 0.0
      %393 = vmatpush1.msra.mxu0 0.0
      %394 = vmatprep.subr.mxu0 0.0
      %395 = vmatpush1.msra.mxu0 0.0
      %396 = vmatprep.subr.mxu0 0.0
      %397 = vmatpush1.msra.mxu0 0.0
      %398 = vmatprep.subr.mxu0 0.0
      %399 = vmatpush1.msra.mxu0 0.0
      %400 = vmatprep.subr.mxu0 0.0
      %401 = vmatpush1.msra.mxu0 0.0
      %402 = vmatprep.subr.mxu0 0.0
      %403 = vmatpush1.msra.mxu0 0.0
      %404 = vmatprep.subr.mxu0 0.0
      %405 = vmatpush1.msra.mxu0 0.0
      %406 = vmatprep.subr.mxu0 0.0
      %407 = vmatpush1.msra.mxu0 0.0
      %408 = vmatprep.subr.mxu0 0.0
      %409 = vmatpush1.msra.mxu0 0.0
      %410 = vmatprep.subr.mxu0 0.0
      %411 = vmatpush1.msra.mxu0 0.0
      %412 = vmatprep.subr.mxu0 0.0
      %413 = vmatpush1.msra.mxu0 0.0
      %414 = vmatprep.subr.mxu0 0.0
      %415 = vmatpush1.msra.mxu0 0.0
      %416 = vmatprep.subr.mxu0 0.0
      %417 = vmatpush1.msra.mxu0 0.0
      %418 = vmatprep.subr.mxu0 0.0
      %419 = vmatpush1.msra.mxu0 0.0
      %420 = vmatprep.mubr.f32.mxu0 0.0
      %421 = vmatmul.mubr.f32.gmra.mrb[0].mxu0 %v333
      %v422 = vpop.f32.mrb[0].mxu0
      %v423 = vadd.f32 %v294, %v422
      %v424 = vpop.f32.mrb[0].mxu0
      %425 = vmatprep.mubr.f32.mxu0 0.0
      %426 = vmatmul.mubr.f32.gmra.mrb[0].mxu0 %v336
      %v427 = vpop.f32.mrb[0].mxu0
      %v428 = vadd.f32 %v299, %v427
      %v429 = vpop.f32.mrb[0].mxu0
      %430 = vmatprep.mubr.f32.mxu0 0.0
      %431 = vmatmul.mubr.f32.gmra.mrb[0].mxu0 %v339
      %v432 = vpop.f32.mrb[0].mxu0
      %v433 = vadd.f32 %v304, %v432
      %v434 = vpop.f32.mrb[0].mxu0
      %435 = vmatprep.mubr.f32.mxu0 0.0
      %436 = vmatmul.mubr.f32.gmra.mrb[0].mxu0 %v342
      %v437 = vpop.f32.mrb[0].mxu0
      %v438 = vadd.f32 %v309, %v437
      %v439 = vpop.f32.mrb[0].mxu0
      %440 = vmatprep.mubr.f32.mxu0 0.0
      %441 = vmatmul.mubr.f32.gmra.mrb[0].mxu0 %v345
      %v442 = vpop.f32.mrb[0].mxu0
      %v443 = vadd.f32 %v314, %v442
      %v444 = vpop.f32.mrb[0].mxu0
      %445 = vmatprep.mubr.f32.mxu0 0.0
      %446 = vmatmul.mubr.f32.gmra.mrb[0].mxu0 %v348
      %v447 = vpop.f32.mrb[0].mxu0
      %v448 = vadd.f32 %v319, %v447
      %v449 = vpop.f32.mrb[0].mxu0
      %450 = vmatprep.mubr.f32.mxu0 0.0
      %451 = vmatmul.mubr.f32.gmra.mrb[0].mxu0 %v351
      %v452 = vpop.f32.mrb[0].mxu0
      %v453 = vadd.f32 %v324, %v452
      %v454 = vpop.f32.mrb[0].mxu0
      %455 = vmatprep.mubr.f32.mxu0 0.0
      %456 = vmatmul.mubr.f32.gmra.mrb[0].mxu0 %v354
      %v457 = vpop.f32.mrb[0].mxu0
      %v458 = vadd.f32 %v329, %v457
      %v459 = vpop.f32.mrb[0].mxu0
      %460 = vdwg.mxu0
      %v461 = vmax.f32 %v423, 0.0
      %v462 = vmax.f32 %v428, 0.0
      %v463 = vmax.f32 %v433, 0.0
      %v464 = vmax.f32 %v438, 0.0
      %v465 = vmax.f32 %v443, 0.0
      %v466 = vmax.f32 %v448, 0.0
      %v467 = vmax.f32 %v453, 0.0
      %v468 = vmax.f32 %v458, 0.0
      %v469 = vld [vmem:[%s3] sm:$0xff]
      %v470 = vld [vmem:[%s3 + $0x8] sm:$0xff]
      %v471 = vld [vmem:[%s3 + $0x10] sm:$0xff]
      %v472 = vld [vmem:[%s3 + $0x18] sm:$0xff]
      %v473 = vld [vmem:[%s3 + $0x20] sm:$0xff]
      %v474 = vld [vmem:[%s3 + $0x28] sm:$0xff]
      %v475 = vld [vmem:[%s3 + $0x30] sm:$0xff]
      %v476 = vld [vmem:[%s3 + $0x38] sm:$0xff]
      %v477 = vld [vmem:[%s4] sm:$0xff]
      %v478 = vld [vmem:[%s4 + $0x8] sm:$0xff]
      %v479 = vld [vmem:[%s4 + $0x10] sm:$0xff]
      %v480 = vld [vmem:[%s4 + $0x18] sm:$0xff]
      %v481 = vld [vmem:[%s4 + $0x20] sm:$0xff]
      %v482 = vld [vmem:[%s4 + $0x28] sm:$0xff]
      %v483 = vld [vmem:[%s4 + $0x30] sm:$0xff]
      %v484 = vld [vmem:[%s4 + $0x38] sm:$0xff]
      %486 = vset.pattern.permute.xlu0 0
      %487 = vperm.xlu0 %486, %v477
      %v488 = vpop.permute.xlu0 %487
      %491 = vset.pattern.permute.xlu0 0
      %492 = vperm.xlu0 %491, %v478
      %v493 = vpop.permute.xlu0 %492
      %496 = vset.pattern.permute.xlu0 0
      %497 = vperm.xlu0 %496, %v479
      %v498 = vpop.permute.xlu0 %497
      %501 = vset.pattern.permute.xlu0 0
      %502 = vperm.xlu0 %501, %v480
      %v503 = vpop.permute.xlu0 %502
      %506 = vset.pattern.permute.xlu0 0
      %507 = vperm.xlu0 %506, %v481
      %v508 = vpop.permute.xlu0 %507
      %511 = vset.pattern.permute.xlu0 0
      %512 = vperm.xlu0 %511, %v482
      %v513 = vpop.permute.xlu0 %512
      %516 = vset.pattern.permute.xlu0 0
      %517 = vperm.xlu0 %516, %v483
      %v518 = vpop.permute.xlu0 %517
      %521 = vset.pattern.permute.xlu0 0
      %522 = vperm.xlu0 %521, %v484
      %v523 = vpop.permute.xlu0 %522
      %vm525 = vcmask 523264
      %v527 = vsel %vm525, %v469, 0
      %v530 = vsel %vm525, %v470, 0
      %v533 = vsel %vm525, %v471, 0
      %v536 = vsel %vm525, %v472, 0
      %v539 = vsel %vm525, %v473, 0
      %v542 = vsel %vm525, %v474, 0
      %v545 = vsel %vm525, %v475, 0
      %v548 = vsel %vm525, %v476, 0
      %550 = vmatprep.subr.mxu0 0.0
      %551 = vmatpush1.msra.mxu0 %v461
      %552 = vmatprep.subr.mxu0 0.0
      %553 = vmatpush1.msra.mxu0 %v462
      %554 = vmatprep.subr.mxu0 0.0
      %555 = vmatpush1.msra.mxu0 %v463
      %556 = vmatprep.subr.mxu0 0.0
      %557 = vmatpush1.msra.mxu0 %v464
      %558 = vmatprep.subr.mxu0 0.0
      %559 = vmatpush1.msra.mxu0 %v465
      %560 = vmatprep.subr.mxu0 0.0
      %561 = vmatpush1.msra.mxu0 %v466
      %562 = vmatprep.subr.mxu0 0.0
      %563 = vmatpush1.msra.mxu0 %v467
      %564 = vmatprep.subr.mxu0 0.0
      %565 = vmatpush1.msra.mxu0 %v468
      %566 = vmatprep.subr.mxu0 0.0
      %567 = vmatpush1.msra.mxu0 0.0
      %568 = vmatprep.subr.mxu0 0.0
      %569 = vmatpush1.msra.mxu0 0.0
      %570 = vmatprep.subr.mxu0 0.0
      %571 = vmatpush1.msra.mxu0 0.0
      %572 = vmatprep.subr.mxu0 0.0
      %573 = vmatpush1.msra.mxu0 0.0
      %574 = vmatprep.subr.mxu0 0.0
      %575 = vmatpush1.msra.mxu0 0.0
      %576 = vmatprep.subr.mxu0 0.0
      %577 = vmatpush1.msra.mxu0 0.0
      %578 = vmatprep.subr.mxu0 0.0
      %579 = vmatpush1.msra.mxu0 0.0
      %580 = vmatprep.subr.mxu0 0.0
      %581 = vmatpush1.msra.mxu0 0.0
      %582 = vmatprep.subr.mxu0 0.0
      %583 = vmatpush1.msra.mxu0 0.0
      %584 = vmatprep.subr.mxu0 0.0
      %585 = vmatpush1.msra.mxu0 0.0
      %586 = vmatprep.subr.mxu0 0.0
      %587 = vmatpush1.msra.mxu0 0.0
      %588 = vmatprep.subr.mxu0 0.0
      %589 = vmatpush1.msra.mxu0 0.0
      %590 = vmatprep.subr.mxu0 0.0
      %591 = vmatpush1.msra.mxu0 0.0
      %592 = vmatprep.subr.mxu0 0.0
      %593 = vmatpush1.msra.mxu0 0.0
      %594 = vmatprep.subr.mxu0 0.0
      %595 = vmatpush1.msra.mxu0 0.0
      %596 = vmatprep.subr.mxu0 0.0
      %597 = vmatpush1.msra.mxu0 0.0
      %598 = vmatprep.subr.mxu0 0.0
      %599 = vmatpush1.msra.mxu0 0.0
      %600 = vmatprep.subr.mxu0 0.0
      %601 = vmatpush1.msra.mxu0 0.0
      %602 = vmatprep.subr.mxu0 0.0
      %603 = vmatpush1.msra.mxu0 0.0
      %604 = vmatprep.subr.mxu0 0.0
      %605 = vmatpush1.msra.mxu0 0.0
      %606 = vmatprep.subr.mxu0 0.0
      %607 = vmatpush1.msra.mxu0 0.0
      %608 = vmatprep.subr.mxu0 0.0
      %609 = vmatpush1.msra.mxu0 0.0
      %610 = vmatprep.subr.mxu0 0.0
      %611 = vmatpush1.msra.mxu0 0.0
      %612 = vmatprep.subr.mxu0 0.0
      %613 = vmatpush1.msra.mxu0 0.0
      %614 = vmatprep.mubr.f32.mxu0 0.0
      %615 = vmatmul.mubr.f32.gmra.mrb[0].mxu0 %v527
      %v616 = vpop.f32.mrb[0].mxu0
      %v617 = vadd.f32 %v488, %v616
      %v618 = vpop.f32.mrb[0].mxu0
      %619 = vmatprep.mubr.f32.mxu0 0.0
      %620 = vmatmul.mubr.f32.gmra.mrb[0].mxu0 %v530
      %v621 = vpop.f32.mrb[0].mxu0
      %v622 = vadd.f32 %v493, %v621
      %v623 = vpop.f32.mrb[0].mxu0
      %624 = vmatprep.mubr.f32.mxu0 0.0
      %625 = vmatmul.mubr.f32.gmra.mrb[0].mxu0 %v533
      %v626 = vpop.f32.mrb[0].mxu0
      %v627 = vadd.f32 %v498, %v626
      %v628 = vpop.f32.mrb[0].mxu0
      %629 = vmatprep.mubr.f32.mxu0 0.0
      %630 = vmatmul.mubr.f32.gmra.mrb[0].mxu0 %v536
      %v631 = vpop.f32.mrb[0].mxu0
      %v632 = vadd.f32 %v503, %v631
      %v633 = vpop.f32.mrb[0].mxu0
      %634 = vmatprep.mubr.f32.mxu0 0.0
      %635 = vmatmul.mubr.f32.gmra.mrb[0].mxu0 %v539
      %v636 = vpop.f32.mrb[0].mxu0
      %v637 = vadd.f32 %v508, %v636
      %v638 = vpop.f32.mrb[0].mxu0
      %639 = vmatprep.mubr.f32.mxu0 0.0
      %640 = vmatmul.mubr.f32.gmra.mrb[0].mxu0 %v542
      %v641 = vpop.f32.mrb[0].mxu0
      %v642 = vadd.f32 %v513, %v641
      %v643 = vpop.f32.mrb[0].mxu0
      %644 = vmatprep.mubr.f32.mxu0 0.0
      %645 = vmatmul.mubr.f32.gmra.mrb[0].mxu0 %v545
      %v646 = vpop.f32.mrb[0].mxu0
      %v647 = vadd.f32 %v518, %v646
      %v648 = vpop.f32.mrb[0].mxu0
      %649 = vmatprep.mubr.f32.mxu0 0.0
      %650 = vmatmul.mubr.f32.gmra.mrb[0].mxu0 %v548
      %v651 = vpop.f32.mrb[0].mxu0
      %v652 = vadd.f32 %v523, %v651
      %v653 = vpop.f32.mrb[0].mxu0
      %654 = vdwg.mxu0
      %v655 = vmax.f32 %v617, 0.0
      %v656 = vmax.f32 %v622, 0.0
      %v657 = vmax.f32 %v627, 0.0
      %v658 = vmax.f32 %v632, 0.0
      %v659 = vmax.f32 %v637, 0.0
      %v660 = vmax.f32 %v642, 0.0
      %v661 = vmax.f32 %v647, 0.0
      %v662 = vmax.f32 %v652, 0.0
      %v663 = vld [vmem:[%s5] sm:$0x1]
      %v664 = vld [vmem:[#allocation2] sm:$0x1]
      %666 = vset.pattern.permute.xlu0 0
      %667 = vperm.xlu0 %666, %v664
      %v668 = vpop.permute.xlu0 %667
      %v670 = vlaneseq
      %v671 = vshrl.u32 %v670, 7
      %v672 = vsub.s32 0, %v671
      %v673 = vrot.slane %v668, %v672
      %v675 = vsel %vm525, %v663, 0
      %677 = vmatprep.subr.mxu0 0.0
      %678 = vmatpush1.msra.mxu0 %v655
      %679 = vmatprep.subr.mxu0 0.0
      %680 = vmatpush1.msra.mxu0 %v656
      %681 = vmatprep.subr.mxu0 0.0
      %682 = vmatpush1.msra.mxu0 %v657
      %683 = vmatprep.subr.mxu0 0.0
      %684 = vmatpush1.msra.mxu0 %v658
      %685 = vmatprep.subr.mxu0 0.0
      %686 = vmatpush1.msra.mxu0 %v659
      %687 = vmatprep.subr.mxu0 0.0
      %688 = vmatpush1.msra.mxu0 %v660
      %689 = vmatprep.subr.mxu0 0.0
      %690 = vmatpush1.msra.mxu0 %v661
      %691 = vmatprep.subr.mxu0 0.0
      %692 = vmatpush1.msra.mxu0 %v662
      %693 = vmatprep.subr.mxu0 0.0
      %694 = vmatpush1.msra.mxu0 0.0
      %695 = vmatprep.subr.mxu0 0.0
      %696 = vmatpush1.msra.mxu0 0.0
      %697 = vmatprep.subr.mxu0 0.0
      %698 = vmatpush1.msra.mxu0 0.0
      %699 = vmatprep.subr.mxu0 0.0
      %700 = vmatpush1.msra.mxu0 0.0
      %701 = vmatprep.subr.mxu0 0.0
      %702 = vmatpush1.msra.mxu0 0.0
      %703 = vmatprep.subr.mxu0 0.0
      %704 = vmatpush1.msra.mxu0 0.0
      %705 = vmatprep.subr.mxu0 0.0
      %706 = vmatpush1.msra.mxu0 0.0
      %707 = vmatprep.subr.mxu0 0.0
      %708 = vmatpush1.msra.mxu0 0.0
      %709 = vmatprep.subr.mxu0 0.0
      %710 = vmatpush1.msra.mxu0 0.0
      %711 = vmatprep.subr.mxu0 0.0
      %712 = vmatpush1.msra.mxu0 0.0
      %713 = vmatprep.subr.mxu0 0.0
      %714 = vmatpush1.msra.mxu0 0.0
      %715 = vmatprep.subr.mxu0 0.0
      %716 = vmatpush1.msra.mxu0 0.0
      %717 = vmatprep.subr.mxu0 0.0
      %718 = vmatpush1.msra.mxu0 0.0
      %719 = vmatprep.subr.mxu0 0.0
      %720 = vmatpush1.msra.mxu0 0.0
      %721 = vmatprep.subr.mxu0 0.0
      %722 = vmatpush1.msra.mxu0 0.0
      %723 = vmatprep.subr.mxu0 0.0
      %724 = vmatpush1.msra.mxu0 0.0
      %725 = vmatprep.subr.mxu0 0.0
      %726 = vmatpush1.msra.mxu0 0.0
      %727 = vmatprep.subr.mxu0 0.0
      %728 = vmatpush1.msra.mxu0 0.0
      %729 = vmatprep.subr.mxu0 0.0
      %730 = vmatpush1.msra.mxu0 0.0
      %731 = vmatprep.subr.mxu0 0.0
      %732 = vmatpush1.msra.mxu0 0.0
      %733 = vmatprep.subr.mxu0 0.0
      %734 = vmatpush1.msra.mxu0 0.0
      %735 = vmatprep.subr.mxu0 0.0
      %736 = vmatpush1.msra.mxu0 0.0
      %737 = vmatprep.subr.mxu0 0.0
      %738 = vmatpush1.msra.mxu0 0.0
      %739 = vmatprep.subr.mxu0 0.0
      %740 = vmatpush1.msra.mxu0 0.0
      %741 = vmatprep.mubr.f32.mxu0 0.0
      %742 = vmatmul.mubr.f32.gmra.mrb[0].mxu0 %v675
      %v743 = vpop.f32.mrb[0].mxu0
      %v744 = vadd.f32 %v673, %v743
      %v745 = vpop.f32.mrb[0].mxu0
      %746 = vdwg.mxu0
      %747 = vst [vmem:[%s273] sm:$0x1] %v744
      %p748 = scmp.lt.s32.totalorder %s20, 2
      %s749 = scalar_select %p748, %s20, 2
      %s750 = scalar_lea.vmem %s7, %s749
      // Predicated region
      $region49: #{critic_high_forward.1} parent=47 // pred_check
        %p751 = pneg %p190
      $region50: #{critic_high_forward.1} parent=47 // pred_check_branch
        %753 = sbr.rel (%p751) target = $region52
      $region51: #{critic_high_forward.1} parent=47 // pred_region
        _
      $region52: #{critic_high_forward.1} parent=47 // pred_fallthru
        _
    $region48: #{critic_high_forward.1} parent=5 // pred_fallthru
      _
    %p754 = scmp.le.s32.totalorder 2, %s15
    // Predicated region
    $region53: #{critic_high_forward.1} parent=5 // pred_check
      %p755 = pneg %p754
    $region54: #{critic_high_forward.1} parent=5 // pred_check_branch
      %757 = sbr.rel (%p755) target = $region56
    $region55: #{critic_high_forward.1} parent=5 // pred_region
      %s758 = ssub.s32 %s15, 2
      // Predicated region
      $region57: #{critic_high_forward.1} parent=55 // pred_check
        %p759 = pneg %p196
      $region58: #{critic_high_forward.1} parent=55 // pred_check_branch
        %761 = sbr.rel (%p759) target = $region60
      $region59: #{critic_high_forward.1} parent=55 // pred_region
        %p762 = scmp.lt.s32.totalorder %s21, 2
        %s763 = scalar_select %p762, %s21, 2
        %s764 = scalar_lea.vmem %s7, %s763
      $region60: #{critic_high_forward.1} parent=55 // pred_fallthru
        _
    $region56: #{critic_high_forward.1} parent=5 // pred_fallthru
      _
  $region6: #{critic_high_forward.1} parent=0 // loop_footer
    %s19 = sadd.s32 1, %s15
  $region7: #{critic_high_forward.1} parent=0 // loop_footer_branch
    %14 = sbr.rel target = $region3
  $region8: #{critic_high_forward.1} parent=0 // loop_exit
    _

</llo_original>
